<compile_context>
chip_gen: v7x
topology: tpu7x:2x2x1
jax: 0.10.0
libtpu: 0.0.40
codegen_flags: <defaults>
</compile_context>

<pallas_src>
import functools

import jax
import jax.numpy as jnp
from jax.experimental import pallas as pl
from jax.experimental.pallas import tpu as pltpu

EPS = 1e-5
LANE = 128
SUBLANE = 8


def _round_up(x, m):
    return (x + m - 1) // m * m


def _cdiv(a, b):
    return -(-a // b)


# -----------------------------------------------------------------------------
# Generation-aware VMEM budget (v7x: 64 MiB physical, v5e/v6e: 128 MiB).
# -----------------------------------------------------------------------------
@functools.lru_cache(maxsize=1)
def _vmem_limit_bytes():
    cap = 128 * 1024 * 1024
    try:
        info = pltpu.get_tpu_info()
        cap = int(getattr(info, "vmem_capacity_bytes", cap))
    except Exception:
        cap = 64 * 1024 * 1024  # conservative fallback (v7x-sized)
    # ~8 MiB headroom for Mosaic scratch; never request more than 112 MiB.
    return max(32 * 1024 * 1024, min(cap - 8 * 1024 * 1024, 112 * 1024 * 1024))


# -----------------------------------------------------------------------------
# Kernels (BN already folded into the weights offline).
# -----------------------------------------------------------------------------
def _resblock_kernel(x_ref, w1_ref, c1_ref, w2_ref, c2_ref, o_ref):
    """Fully-resident weights: single grid axis over batch tiles."""
    x = x_ref[...]                                                # [TN, Hp]
    h = jnp.dot(x.astype(jnp.bfloat16), w1_ref[...],
                preferred_element_type=jnp.float32)
    # ReLU + bias; materialize inter-layer activation once in bf16.
    h = jnp.maximum(h + c1_ref[...], 0.0).astype(jnp.bfloat16)
    # Dropout(p): identity in eval mode.
    y = jnp.dot(h, w2_ref[...], preferred_element_type=jnp.float32)
    y = jnp.maximum(y + c2_ref[...], 0.0)
    # Dropout(p): identity in eval mode.
    o_ref[...] = (x.astype(jnp.float32) + y).astype(o_ref.dtype)  # residual


def _resblock_kernel_ktiled(x_ref, w1_ref, c1_ref, w2_ref, c2_ref, o_ref, acc_ref):
    """K-tiled over the 4H axis: grid = (batch tiles, 4H tiles)."""
    k = pl.program_id(1)

    @pl.when(k == 0)
    def _():
        acc_ref[...] = jnp.zeros_like(acc_ref)

    x = x_ref[...]
    h = jnp.dot(x.astype(jnp.bfloat16), w1_ref[...],
                preferred_element_type=jnp.float32)
    h = jnp.maximum(h + c1_ref[...], 0.0).astype(jnp.bfloat16)
    acc_ref[...] += jnp.dot(h, w2_ref[...], preferred_element_type=jnp.float32)

    @pl.when(k == pl.num_programs(1) - 1)
    def _():
        y = jnp.maximum(acc_ref[...] + c2_ref[...], 0.0)
        o_ref[...] = (x.astype(jnp.float32) + y).astype(o_ref.dtype)


# -----------------------------------------------------------------------------
# pallas_call wrapper
# -----------------------------------------------------------------------------
@functools.partial(jax.jit, static_argnames=("block_n", "tile_k", "vmem_limit"))
def _resblock_call(x_pad, w1, c1, w2, c2, *, block_n, tile_k, vmem_limit):
    n_pad, hp = x_pad.shape
    h4p = w1.shape[1]
    n_tiles = n_pad // block_n
    resident = pl.Buffered(1)  # grid-invariant operands: single-buffer

    if tile_k == h4p:
        grid = (n_tiles,)
        in_specs = [
            pl.BlockSpec((block_n, hp), lambda i: (i, 0)),                      # x
            pl.BlockSpec((hp, h4p), lambda i: (0, 0), pipeline_mode=resident),  # w1
            pl.BlockSpec((1, h4p), lambda i: (0, 0), pipeline_mode=resident),   # c1
            pl.BlockSpec((h4p, hp), lambda i: (0, 0), pipeline_mode=resident),  # w2
            pl.BlockSpec((1, hp), lambda i: (0, 0), pipeline_mode=resident),    # c2
        ]
        out_specs = pl.BlockSpec((block_n, hp), lambda i: (i, 0))
        kernel = _resblock_kernel
        scratch = []
        dims = ("parallel",)
    else:
        grid = (n_tiles, h4p // tile_k)
        in_specs = [
            pl.BlockSpec((block_n, hp), lambda i, k: (i, 0)),                   # x
            pl.BlockSpec((hp, tile_k), lambda i, k: (0, k)),                    # w1 col tile
            pl.BlockSpec((1, tile_k), lambda i, k: (0, k)),                     # c1 tile
            pl.BlockSpec((tile_k, hp), lambda i, k: (k, 0)),                    # w2 row tile
            pl.BlockSpec((1, hp), lambda i, k: (0, 0), pipeline_mode=resident), # c2
        ]
        out_specs = pl.BlockSpec((block_n, hp), lambda i, k: (i, 0))
        kernel = _resblock_kernel_ktiled
        scratch = [pltpu.VMEM((block_n, hp), jnp.float32)]
        dims = ("parallel", "arbitrary")

    return pl.pallas_call(
        kernel,
        out_shape=jax.ShapeDtypeStruct((n_pad, hp), x_pad.dtype),
        grid_spec=pltpu.PrefetchScalarGridSpec(
            num_scalar_prefetch=0,
            grid=grid,
            in_specs=in_specs,
            out_specs=out_specs,
            scratch_shapes=scratch,
        ),
        compiler_params=pltpu.CompilerParams(
            dimension_semantics=dims,
            vmem_limit_bytes=vmem_limit,
        ),
    )(x_pad, w1, c1, w2, c2)


# -----------------------------------------------------------------------------
# Tiling heuristics
# -----------------------------------------------------------------------------
def _choose_batch_tiling(n, max_block_n):
    num_tiles = max(1, _cdiv(n, max_block_n))
    if num_tiles > 1 and num_tiles % 2:
        num_tiles += 1  # even grid keeps v7x's two TensorCores balanced
    block_n = _round_up(_cdiv(n, num_tiles), SUBLANE)
    return block_n, num_tiles


def _choose_tile_k(block_n, hp, h4p, x_itemsize, vmem_limit):
    """Pick the 4H tile size so the per-step working set fits the VMEM budget."""
    def fits(tk, resident_weights):
        w_bufs = 1 if resident_weights else 2            # single vs double buffered
        weights = w_bufs * 2 * hp * tk * 2               # bf16 w1/w2 tiles
        biases = w_bufs * (tk + hp) * 4
        io = 2 * block_n * hp * (x_itemsize + 4)         # double-buffered x in + out
        inter = block_n * tk * (4 + 2)                   # f32 pre-ReLU + bf16 activation
        acc = 0 if resident_weights else block_n * hp * 4
        return weights + biases + io + inter + acc <= 0.75 * vmem_limit

    if fits(h4p, True):
        return h4p
    for tk in (4096, 2048, 1024, 512, 256, 128):
        if tk < h4p and h4p % tk == 0 and fits(tk, False):
            return tk
    return LANE


# -----------------------------------------------------------------------------
# One-time parameter transform: fold BN (input side) into each Linear in f32,
# cast weights to bf16, zero-pad feature dims to multiples of 128 lanes.
# -----------------------------------------------------------------------------
def fold_and_pad_params(params, hidden_size):
    H, H4 = hidden_size, 4 * hidden_size
    Hp, H4p = _round_up(H, LANE), _round_up(H4, LANE)

    # BN(x) = x * scale + shift, with scale = g * rsqrt(rv + eps).
    scale1 = params["g1"] * jax.lax.rsqrt(params["rv1"] + EPS)     # [1, H]
    shift1 = params["b1"] - params["rm1"] * scale1
    w1f = params["w1"] * scale1.reshape(H, 1)                      # [H, 4H]
    c1f = params["c1"] + shift1 @ params["w1"]                     # [1, 4H]

    scale2 = params["g2"] * jax.lax.rsqrt(params["rv2"] + EPS)     # [1, 4H]
    shift2 = params["b2"] - params["rm2"] * scale2
    w2f = params["w2"] * scale2.reshape(H4, 1)                     # [4H, H]
    c2f = params["c2"] + shift2 @ params["w2"]                     # [1, H]

    w1p = jnp.zeros((Hp, H4p), jnp.bfloat16).at[:H, :H4].set(w1f.astype(jnp.bfloat16))
    c1p = jnp.zeros((1, H4p), jnp.float32).at[:, :H4].set(c1f)
    w2p = jnp.zeros((H4p, Hp), jnp.bfloat16).at[:H4, :H].set(w2f.astype(jnp.bfloat16))
    c2p = jnp.zeros((1, Hp), jnp.float32).at[:, :H].set(c2f)
    return {"w1": w1p, "c1": c1p, "w2": w2p, "c2": c2p}


def residual_block_with_dropout(x, folded_params, *, max_block_n=512,
                                io_dtype=None, force_tile_k=None):
    """x: [N, H]. folded_params: output of fold_and_pad_params. Eval-mode forward."""
    N, H = x.shape
    hp, h4p = folded_params["w1"].shape

    block_n, num_tiles = _choose_batch_tiling(N, max_block_n)
    n_pad = block_n * num_tiles

    in_dtype = x.dtype if io_dtype is None else io_dtype
    x_pad = jnp.zeros((n_pad, hp), in_dtype).at[:N, :H].set(x.astype(in_dtype))

    vmem_limit = _vmem_limit_bytes()
    if force_tile_k is not None:
        tile_k = int(force_tile_k)
    else:
        tile_k = _choose_tile_k(block_n, hp, h4p, x_pad.dtype.itemsize, vmem_limit)

    out = _resblock_call(x_pad, folded_params["w1"], folded_params["c1"],
                         folded_params["w2"], folded_params["c2"],
                         block_n=block_n, tile_k=tile_k, vmem_limit=vmem_limit)
    return out[:N, :H].astype(x.dtype)


# -----------------------------------------------------------------------------
# Synthetic parameters + references
# -----------------------------------------------------------------------------
def init_params(key, hidden_size):
    H, H4 = hidden_size, 4 * hidden_size
    ks = jax.random.split(key, 12)
    u = lambda k, shape, lim: jax.random.uniform(k, shape, jnp.float32, -lim, lim)
    return {
        # BatchNorm1d(H): weight, bias, running_mean, running_var
        "g1": u(ks[0], (1, H), 1.0) + 1.0,
        "b1": u(ks[1], (1, H), 0.5),
        "rm1": u(ks[2], (1, H), 0.5),
        "rv1": jax.random.uniform(ks[3], (1, H), jnp.float32, 0.5, 1.5),
        # Linear(H, 4H): stored pre-transposed as [H, 4H]; bias [1, 4H]
        "w1": u(ks[4], (H, H4), 1.0 / (H ** 0.5)),
        "c1": u(ks[5], (1, H4), 1.0 / (H ** 0.5)),
        # BatchNorm1d(4H)
        "g2": u(ks[6], (1, H4), 1.0) + 1.0,
        "b2": u(ks[7], (1, H4), 0.5),
        "rm2": u(ks[8], (1, H4), 0.5),
        "rv2": jax.random.uniform(ks[9], (1, H4), jnp.float32, 0.5, 1.5),
        # Linear(4H, H): pre-transposed as [4H, H]; bias [1, H]
        "w2": u(ks[10], (H4, H), 1.0 / (H4 ** 0.5)),
        "c2": u(ks[11], (1, H), 1.0 / (H4 ** 0.5)),
    }


def reference_f32(x, p):
    """Pure-JAX f32 reference of the eval-mode forward pass (module semantics)."""
    h = (x - p["rm1"]) / jnp.sqrt(p["rv1"] + EPS) * p["g1"] + p["b1"]
    h = jnp.maximum(h @ p["w1"] + p["c1"], 0.0)
    h = (h - p["rm2"]) / jnp.sqrt(p["rv2"] + EPS) * p["g2"] + p["b2"]
    h = jnp.maximum(h @ p["w2"] + p["c2"], 0.0)
    return x + h


def reference_bf16(x, folded, H):
    """Reference mimicking the kernel's folded-BN bf16 arithmetic."""
    Hp = folded["w1"].shape[0]
    N = x.shape[0]
    x_pad = jnp.zeros((N, Hp), x.dtype).at[:, :H].set(x)
    h = jnp.dot(x_pad.astype(jnp.bfloat16), folded["w1"],
                preferred_element_type=jnp.float32)
    h = jnp.maximum(h + folded["c1"], 0.0).astype(jnp.bfloat16)
    h = jnp.dot(h, folded["w2"], preferred_element_type=jnp.float32)
    h = jnp.maximum(h + folded["c2"], 0.0)
    return (x_pad + h)[:, :H]


if __name__ == "__main__":
    key = jax.random.PRNGKey(0)
    kx, kp, kx2, kp2 = jax.random.split(key, 4)

    # --- Test 1: spec-sized shapes, fully-resident weight path --------------
    hidden_size, batch = 32, 8
    dropout_p = 0.1  # identity in the eval-mode forward pass
    x = jax.random.normal(kx, (batch, hidden_size), dtype=jnp.float32)
    params = init_params(kp, hidden_size)
    folded = fold_and_pad_params(params, hidden_size)  # one-time transform

    out = jax.block_until_ready(residual_block_with_dropout(x, folded))
    assert out.shape == (batch, hidden_size)
    ref_q = reference_bf16(x, folded, hidden_size)
    assert jnp.allclose(out, ref_q, atol=1e-3, rtol=1e-3), "mismatch vs bf16 reference"
    ref = reference_f32(x, params)
    assert jnp.allclose(out, ref, atol=5e-2, rtol=5e-2), "mismatch vs f32 reference"

    # --- Test 2: force the K-tiled (4H) path + multi-tile batch grid --------
    hidden_size2, batch2 = 64, 24
    x2 = jax.random.normal(kx2, (batch2, hidden_size2), dtype=jnp.float32)
    params2 = init_params(kp2, hidden_size2)
    folded2 = fold_and_pad_params(params2, hidden_size2)
    out2 = jax.block_until_ready(
        residual_block_with_dropout(x2, folded2, max_block_n=8, force_tile_k=LANE))
    ref2_q = reference_bf16(x2, folded2, hidden_size2)
    assert jnp.allclose(out2, ref2_q, atol=2e-3, rtol=2e-3), "mismatch (K-tiled path)"

    # --- Test 3: bf16 I/O variant (HBM-bound small-H regime) ----------------
    out3 = jax.block_until_ready(
        residual_block_with_dropout(x, folded, io_dtype=jnp.bfloat16))
    assert jnp.allclose(out3, ref, atol=8e-2, rtol=8e-2), "mismatch (bf16 I/O path)"

    print("KERNEL_OK")
</pallas_src>

<mosaic_0001>
module attributes {stable_mosaic.version = 11 : i64} {
  func.func @_resblock_kernel(%arg0: i32, %arg1: memref<8x128xf32, #tpu.memory_space<vmem>>, %arg2: memref<128x128xbf16, #tpu.memory_space<vmem>>, %arg3: memref<1x128xf32, #tpu.memory_space<vmem>>, %arg4: memref<128x128xbf16, #tpu.memory_space<vmem>>, %arg5: memref<1x128xf32, #tpu.memory_space<vmem>>, %arg6: memref<8x128xf32, #tpu.memory_space<vmem>>) attributes {dimension_semantics = [#tpu.dimension_semantics<parallel>], iteration_bounds = array<i64: 1>, scalar_prefetch = 0 : i64, scratch_operands = 0 : i64, tpu.core_type = #tpu.core_type<tc>, window_params = [{transform_indices = @transform_0, window_bounds = array<i64: 8, 128>}, {pipeline_mode = #tpu.pipeline_mode<synchronous>, transform_indices = @transform_1, window_bounds = array<i64: 128, 128>}, {pipeline_mode = #tpu.pipeline_mode<synchronous>, transform_indices = @transform_2, window_bounds = array<i64: 1, 128>}, {pipeline_mode = #tpu.pipeline_mode<synchronous>, transform_indices = @transform_3, window_bounds = array<i64: 128, 128>}, {pipeline_mode = #tpu.pipeline_mode<synchronous>, transform_indices = @transform_4, window_bounds = array<i64: 1, 128>}, {transform_indices = @transform_5, window_bounds = array<i64: 8, 128>}]} {
    %c0 = arith.constant 0 : index
    %c0_0 = arith.constant 0 : index
    %0 = vector.load %arg1[%c0, %c0_0] : memref<8x128xf32, #tpu.memory_space<vmem>>, vector<8x128xf32>
    %1 = arith.truncf %0 : vector<8x128xf32> to vector<8x128xbf16>
    %c0_1 = arith.constant 0 : index
    %c0_2 = arith.constant 0 : index
    %2 = vector.load %arg2[%c0_1, %c0_2] : memref<128x128xbf16, #tpu.memory_space<vmem>>, vector<128x128xbf16>
    %cst = arith.constant dense<0.000000e+00> : vector<8x128xf32>
    %3 = tpu.matmul %1, %2, %cst {dimension_numbers = #tpu.dot_dimension_numbers<[1], [0], [0], [1], [0, 0, 1, 1], [], []>} : vector<8x128xbf16>, vector<128x128xbf16>, vector<8x128xf32> -> vector<8x128xf32>
    %c0_3 = arith.constant 0 : index
    %c0_4 = arith.constant 0 : index
    %4 = vector.load %arg3[%c0_3, %c0_4] : memref<1x128xf32, #tpu.memory_space<vmem>>, vector<1x128xf32>
    %5 = vector.broadcast %4 : vector<1x128xf32> to vector<8x128xf32>
    %6 = arith.addf %3, %5 : vector<8x128xf32>
    %cst_5 = arith.constant 0.000000e+00 : f32
    %7 = vector.broadcast %cst_5 : f32 to vector<8x128xf32>
    %8 = arith.maximumf %6, %7 : vector<8x128xf32>
    %9 = arith.truncf %8 : vector<8x128xf32> to vector<8x128xbf16>
    %c0_6 = arith.constant 0 : index
    %c0_7 = arith.constant 0 : index
    %10 = vector.load %arg4[%c0_6, %c0_7] : memref<128x128xbf16, #tpu.memory_space<vmem>>, vector<128x128xbf16>
    %cst_8 = arith.constant dense<0.000000e+00> : vector<8x128xf32>
    %11 = tpu.matmul %9, %10, %cst_8 {dimension_numbers = #tpu.dot_dimension_numbers<[1], [0], [0], [1], [0, 0, 1, 1], [], []>} : vector<8x128xbf16>, vector<128x128xbf16>, vector<8x128xf32> -> vector<8x128xf32>
    %c0_9 = arith.constant 0 : index
    %c0_10 = arith.constant 0 : index
    %12 = vector.load %arg5[%c0_9, %c0_10] : memref<1x128xf32, #tpu.memory_space<vmem>>, vector<1x128xf32>
    %13 = vector.broadcast %12 : vector<1x128xf32> to vector<8x128xf32>
    %14 = arith.addf %11, %13 : vector<8x128xf32>
    %cst_11 = arith.constant 0.000000e+00 : f32
    %15 = vector.broadcast %cst_11 : f32 to vector<8x128xf32>
    %16 = arith.maximumf %14, %15 : vector<8x128xf32>
    %17 = arith.addf %0, %16 : vector<8x128xf32>
    %c0_12 = arith.constant 0 : index
    %c0_13 = arith.constant 0 : index
    %18 = vector.load %arg6[%c0_12, %c0_13] : memref<8x128xf32, #tpu.memory_space<vmem>>, vector<8x128xf32>
    tpu.vector_store %arg6[%c0_12, %c0_13], %17 {strides = array<i32>} : memref<8x128xf32, #tpu.memory_space<vmem>>, vector<8x128xf32>,
    return
  }
  func.func @transform_0(%arg0: i32) -> (i32, i32) {
    %c0_i32 = arith.constant 0 : i32
    %c0_i32_0 = arith.constant 0 : i32
    return %arg0, %c0_i32 : i32, i32
  }
  func.func @transform_1(%arg0: i32) -> (i32, i32) {
    %c0_i32 = arith.constant 0 : i32
    %c0_i32_0 = arith.constant 0 : i32
    %c0_i32_1 = arith.constant 0 : i32
    return %c0_i32, %c0_i32_0 : i32, i32
  }
  func.func @transform_2(%arg0: i32) -> (i32, i32) {
    %c0_i32 = arith.constant 0 : i32
    %c0_i32_0 = arith.constant 0 : i32
    %c0_i32_1 = arith.constant 0 : i32
    return %c0_i32, %c0_i32_0 : i32, i32
  }
  func.func @transform_3(%arg0: i32) -> (i32, i32) {
    %c0_i32 = arith.constant 0 : i32
    %c0_i32_0 = arith.constant 0 : i32
    %c0_i32_1 = arith.constant 0 : i32
    return %c0_i32, %c0_i32_0 : i32, i32
  }
  func.func @transform_4(%arg0: i32) -> (i32, i32) {
    %c0_i32 = arith.constant 0 : i32
    %c0_i32_0 = arith.constant 0 : i32
    %c0_i32_1 = arith.constant 0 : i32
    return %c0_i32, %c0_i32_0 : i32, i32
  }
  func.func @transform_5(%arg0: i32) -> (i32, i32) {
    %c0_i32 = arith.constant 0 : i32
    %c0_i32_0 = arith.constant 0 : i32
    return %arg0, %c0_i32 : i32, i32
  }
}

</mosaic_0001>

<llo_original>
// kernel: _resblock_call.1
$region0: #{_resblock_call.1}
  #allocation0 [shape = 'u32[]', space=smem, size = 0x4, offset = 0x4, fixed_abs, tag = 'smem constant byte address 0x4 - core index']
  #allocation1 [shape = 'u32[144,128]{1,0:T(1,128)}', space=vmem, size = 0x12000, scoped, tag = 'internal scratch']
  %s0 = inlined_call_operand.hbm [shape: f32[8,128], index: 0, kind: input, shape index: {}]
  %s1 = inlined_call_operand.hbm [shape: bf16[128,128], index: 1, kind: input, shape index: {}]
  %s2 = inlined_call_operand.vmem [shape: f32[1,128], index: 2, kind: input, shape index: {}]
  %s3 = inlined_call_operand.hbm [shape: bf16[128,128], index: 3, kind: input, shape index: {}]
  %s4 = inlined_call_operand.vmem [shape: f32[1,128], index: 4, kind: input, shape index: {}]
  %s5 = inlined_call_operand.hbm [shape: f32[8,128], index: 5, kind: output, shape index: {}]
  %s6 = sld [smem:[#allocation0]]
  $region42: #{_resblock_call.1} parent=0
    _
  %s8 = ssub.s32 1, %s6
  %s9 = scalar_select 0, %s8, %s6
  $region1: #{_resblock_call.1} parent=0
    #allocation2 [shape = 'u8[4096]{0}', space=vmem, size = 0x1000, scoped, tag = 'input window, operand 0, single buffered']
    #allocation3 [shape = 's32[1]{0}', space=sflag, size = 0x4, scoped, tag = 'scoped memory for _resblock_call.1']
    #allocation4 [shape = 's32[1]{0}', space=sflag, size = 0x4, scoped, tag = 'scoped memory for _resblock_call.1']
    #allocation5 [shape = 'u8[32768]{0}', space=vmem, size = 0x8000, scoped, tag = 'input window, operand 1, single buffered']
    #allocation6 [shape = 's32[1]{0}', space=sflag, size = 0x4, scoped, tag = 'scoped memory for _resblock_call.1']
    #allocation7 [shape = 'u8[32768]{0}', space=vmem, size = 0x8000, scoped, tag = 'input window, operand 3, single buffered']
    #allocation8 [shape = 'u8[4096]{0}', space=vmem, size = 0x1000, scoped, tag = 'output window, operand 0, single buffered']
    %10 = vsyncpa [#allocation3], 0
    %11 = vsyncpa [#allocation6], 0
    %12 = vsyncpa [#allocation4], 0
    // Predicated region
    $region2: #{_resblock_call.1} parent=1 // pred_check
      _
    $region3: #{_resblock_call.1} parent=1 // pred_check_branch
      %14 = sbr.rel (0) target = $region5
    $region4: #{_resblock_call.1} parent=1 // pred_region
      %s16 = ssub.s32 128, 128
      %17 = vsyncadd [#allocation3], %s16
      %s19 = sshll.u32 [#allocation2], 4
      %s20 = int_to_ptr.vmem [resolvable:$true] %s19
      %22 = dma.hbm_to_vmem [thread:$0]  %s0, 128, %s20, [#allocation3]
    $region5: #{_resblock_call.1} parent=1 // pred_fallthru
      _
    // Predicated region
    $region6: #{_resblock_call.1} parent=1 // pred_check
      _
    $region7: #{_resblock_call.1} parent=1 // pred_check_branch
      %24 = sbr.rel (0) target = $region9
    $region8: #{_resblock_call.1} parent=1 // pred_region
      %s26 = ssub.s32 1024, 1024
      %27 = vsyncadd [#allocation6], %s26
      %s28 = sshll.u32 [#allocation5], 4
      %s29 = int_to_ptr.vmem [resolvable:$true] %s28
      %34 = dma.hbm_to_vmem [thread:$0]  %s1, 1024, %s29, [#allocation6], 64, 64, 4
    $region9: #{_resblock_call.1} parent=1 // pred_fallthru
      _
    // Predicated region
    $region10: #{_resblock_call.1} parent=1 // pred_check
      _
    $region11: #{_resblock_call.1} parent=1 // pred_check_branch
      %36 = sbr.rel (0) target = $region13
    $region12: #{_resblock_call.1} parent=1 // pred_region
      _
    $region13: #{_resblock_call.1} parent=1 // pred_fallthru
      _
    // Predicated region
    $region14: #{_resblock_call.1} parent=1 // pred_check
      _
    $region15: #{_resblock_call.1} parent=1 // pred_check_branch
      %38 = sbr.rel (0) target = $region17
    $region16: #{_resblock_call.1} parent=1 // pred_region
      %s40 = ssub.s32 1024, 1024
      %41 = vsyncadd [#allocation6], %s40
      %s42 = sshll.u32 [#allocation7], 4
      %s43 = int_to_ptr.vmem [resolvable:$true] %s42
      %48 = dma.hbm_to_vmem [thread:$0]  %s3, 1024, %s43, [#allocation6], 64, 64, 4
    $region17: #{_resblock_call.1} parent=1 // pred_fallthru
      _
    // Predicated region
    $region18: #{_resblock_call.1} parent=1 // pred_check
      _
    $region19: #{_resblock_call.1} parent=1 // pred_check_branch
      %50 = sbr.rel (0) target = $region21
    $region20: #{_resblock_call.1} parent=1 // pred_region
      _
    $region21: #{_resblock_call.1} parent=1 // pred_fallthru
      _
    // Predicated region
    $region22: #{_resblock_call.1} parent=1 // pred_check
      _
    $region23: #{_resblock_call.1} parent=1 // pred_check_branch
      %52 = sbr.rel (0) target = $region25
    $region24: #{_resblock_call.1} parent=1 // pred_region
      %53 = dma.done [#allocation3], 128
    $region25: #{_resblock_call.1} parent=1 // pred_fallthru
      _
    // Predicated region
    $region26: #{_resblock_call.1} parent=1 // pred_check
      _
    $region27: #{_resblock_call.1} parent=1 // pred_check_branch
      %55 = sbr.rel (0) target = $region29
    $region28: #{_resblock_call.1} parent=1 // pred_region
      %56 = dma.done [#allocation6], 1024
    $region29: #{_resblock_call.1} parent=1 // pred_fallthru
      _
    // Predicated region
    $region30: #{_resblock_call.1} parent=1 // pred_check
      _
    $region31: #{_resblock_call.1} parent=1 // pred_check_branch
      %58 = sbr.rel (0) target = $region33
    $region32: #{_resblock_call.1} parent=1 // pred_region
      %59 = dma.done [#allocation6], 1024
    $region33: #{_resblock_call.1} parent=1 // pred_fallthru
      _
    %v61 = vld [vmem:[#allocation2] sm:$0xff]
    %v62 = vpack.c.bf16 %v61, %v61
    %v63 = vld [vmem:[#allocation5] sm:$0xf]
    %v64 = vld [vmem:[#allocation5 + $0x4] sm:$0xf]
    %v65 = vld [vmem:[#allocation5 + $0x8] sm:$0xf]
    %v66 = vld [vmem:[#allocation5 + $0xc] sm:$0xf]
    %v67 = vld [vmem:[#allocation5 + $0x10] sm:$0xf]
    %v68 = vld [vmem:[#allocation5 + $0x14] sm:$0xf]
    %v69 = vld [vmem:[#allocation5 + $0x18] sm:$0xf]
    %v70 = vld [vmem:[#allocation5 + $0x1c] sm:$0xf]
    %v71 = vld [vmem:[#allocation5 + $0x20] sm:$0xf]
    %v72 = vld [vmem:[#allocation5 + $0x24] sm:$0xf]
    %v73 = vld [vmem:[#allocation5 + $0x28] sm:$0xf]
    %v74 = vld [vmem:[#allocation5 + $0x2c] sm:$0xf]
    %v75 = vld [vmem:[#allocation5 + $0x30] sm:$0xf]
    %v76 = vld [vmem:[#allocation5 + $0x34] sm:$0xf]
    %v77 = vld [vmem:[#allocation5 + $0x38] sm:$0xf]
    %v78 = vld [vmem:[#allocation5 + $0x3c] sm:$0xf]
    %v79 = vld [vmem:[%s2] sm:$0x1]
    %v81 = vlaneseq
    %v82 = vshrl.u32 %v81, 7
    %v83 = vsub.s32 0, %v82
    %v84 = vrot.slane %v79, %v83
    %v102 = vunpack.c.l.b16 %v63
    %v103 = vunpack.c.l.b16 %v64
    %v104 = vunpack.c.l.b16 %v65
    %v105 = vunpack.c.l.b16 %v66
    %v106 = vunpack.c.l.b16 %v67
    %v107 = vunpack.c.l.b16 %v68
    %v108 = vunpack.c.l.b16 %v69
    %v109 = vunpack.c.l.b16 %v70
    %v110 = vunpack.c.l.b16 %v71
    %v111 = vunpack.c.l.b16 %v72
    %v112 = vunpack.c.l.b16 %v73
    %v113 = vunpack.c.l.b16 %v74
    %v114 = vunpack.c.l.b16 %v75
    %v115 = vunpack.c.l.b16 %v76
    %v116 = vunpack.c.l.b16 %v77
    %v117 = vunpack.c.l.b16 %v78
    %v118 = vpack.c.b16 %v103, %v102
    %v119 = vpack.c.b16 %v105, %v104
    %v120 = vpack.c.b16 %v107, %v106
    %v121 = vpack.c.b16 %v109, %v108
    %v122 = vpack.c.b16 %v111, %v110
    %v123 = vpack.c.b16 %v113, %v112
    %v124 = vpack.c.b16 %v115, %v114
    %v125 = vpack.c.b16 %v117, %v116
    %134 = vmatprep.subr.bf16.mxu0 0
    %135 = vmatpush1.bf16.msra.mxu0 %v118
    %136 = vmatprep.subr.bf16.mxu0 0
    %137 = vmatpush1.bf16.msra.mxu0 %v119
    %138 = vmatprep.subr.bf16.mxu0 0
    %139 = vmatpush1.bf16.msra.mxu0 %v120
    %140 = vmatprep.subr.bf16.mxu0 0
    %141 = vmatpush1.bf16.msra.mxu0 %v121
    %142 = vmatprep.subr.bf16.mxu0 0
    %143 = vmatpush1.bf16.msra.mxu0 %v122
    %144 = vmatprep.subr.bf16.mxu0 0
    %145 = vmatpush1.bf16.msra.mxu0 %v123
    %146 = vmatprep.subr.bf16.mxu0 0
    %147 = vmatpush1.bf16.msra.mxu0 %v124
    %148 = vmatprep.subr.bf16.mxu0 0
    %149 = vmatpush1.bf16.msra.mxu0 %v125
    %150 = vmatprep.subr.bf16.mxu0 0
    %151 = vmatpush1.bf16.msra.mxu0 0
    %152 = vmatprep.subr.bf16.mxu0 0
    %153 = vmatpush1.bf16.msra.mxu0 0
    %154 = vmatprep.subr.bf16.mxu0 0
    %155 = vmatpush1.bf16.msra.mxu0 0
    %156 = vmatprep.subr.bf16.mxu0 0
    %157 = vmatpush1.bf16.msra.mxu0 0
    %158 = vmatprep.subr.bf16.mxu0 0
    %159 = vmatpush1.bf16.msra.mxu0 0
    %160 = vmatprep.subr.bf16.mxu0 0
    %161 = vmatpush1.bf16.msra.mxu0 0
    %162 = vmatprep.subr.bf16.mxu0 0
    %163 = vmatpush1.bf16.msra.mxu0 0
    %164 = vmatprep.subr.bf16.mxu0 0
    %165 = vmatpush1.bf16.msra.mxu0 0
    %166 = vmatprep.mubr.bf16.mxu0 0
    %167 = vmatmul.mubr.bf16.gmra.mrb[0].mxu0 %v62
    %v168 = vpop.f32.mrb[0].mxu0
    %v169 = vadd.f32 %v84, %v168
    %v170 = vpop.f32.mrb[0].mxu0
    %v171 = vpop.f32.mrb[0].mxu0
    %v172 = vpop.f32.mrb[0].mxu0
    %173 = vdwg.mxu0
    %v174 = vmax.f32 %v169, 0.0
    %v175 = vpack.c.bf16 %v174, %v174
    %v176 = vld [vmem:[#allocation7] sm:$0xf]
    %v177 = vld [vmem:[#allocation7 + $0x4] sm:$0xf]
    %v178 = vld [vmem:[#allocation7 + $0x8] sm:$0xf]
    %v179 = vld [vmem:[#allocation7 + $0xc] sm:$0xf]
    %v180 = vld [vmem:[#allocation7 + $0x10] sm:$0xf]
    %v181 = vld [vmem:[#allocation7 + $0x14] sm:$0xf]
    %v182 = vld [vmem:[#allocation7 + $0x18] sm:$0xf]
    %v183 = vld [vmem:[#allocation7 + $0x1c] sm:$0xf]
    %v184 = vld [vmem:[#allocation7 + $0x20] sm:$0xf]
    %v185 = vld [vmem:[#allocation7 + $0x24] sm:$0xf]
    %v186 = vld [vmem:[#allocation7 + $0x28] sm:$0xf]
    %v187 = vld [vmem:[#allocation7 + $0x2c] sm:$0xf]
    %v188 = vld [vmem:[#allocation7 + $0x30] sm:$0xf]
    %v189 = vld [vmem:[#allocation7 + $0x34] sm:$0xf]
    %v190 = vld [vmem:[#allocation7 + $0x38] sm:$0xf]
    %v191 = vld [vmem:[#allocation7 + $0x3c] sm:$0xf]
    %v192 = vld [vmem:[%s4] sm:$0x1]
    %v194 = vlaneseq
    %v195 = vshrl.u32 %v194, 7
    %v196 = vsub.s32 0, %v195
    %v197 = vrot.slane %v192, %v196
    %v215 = vunpack.c.l.b16 %v176
    %v216 = vunpack.c.l.b16 %v177
    %v217 = vunpack.c.l.b16 %v178
    %v218 = vunpack.c.l.b16 %v179
    %v219 = vunpack.c.l.b16 %v180
    %v220 = vunpack.c.l.b16 %v181
    %v221 = vunpack.c.l.b16 %v182
    %v222 = vunpack.c.l.b16 %v183
    %v223 = vunpack.c.l.b16 %v184
    %v224 = vunpack.c.l.b16 %v185
    %v225 = vunpack.c.l.b16 %v186
    %v226 = vunpack.c.l.b16 %v187
    %v227 = vunpack.c.l.b16 %v188
    %v228 = vunpack.c.l.b16 %v189
    %v229 = vunpack.c.l.b16 %v190
    %v230 = vunpack.c.l.b16 %v191
    %v231 = vpack.c.b16 %v216, %v215
    %v232 = vpack.c.b16 %v218, %v217
    %v233 = vpack.c.b16 %v220, %v219
    %v234 = vpack.c.b16 %v222, %v221
    %v235 = vpack.c.b16 %v224, %v223
    %v236 = vpack.c.b16 %v226, %v225
    %v237 = vpack.c.b16 %v228, %v227
    %v238 = vpack.c.b16 %v230, %v229
    %247 = vmatprep.subr.bf16.mxu0 0
    %248 = vmatpush1.bf16.msra.mxu0 %v231
    %249 = vmatprep.subr.bf16.mxu0 0
    %250 = vmatpush1.bf16.msra.mxu0 %v232
    %251 = vmatprep.subr.bf16.mxu0 0
    %252 = vmatpush1.bf16.msra.mxu0 %v233
    %253 = vmatprep.subr.bf16.mxu0 0
    %254 = vmatpush1.bf16.msra.mxu0 %v234
    %255 = vmatprep.subr.bf16.mxu0 0
    %256 = vmatpush1.bf16.msra.mxu0 %v235
    %257 = vmatprep.subr.bf16.mxu0 0
    %258 = vmatpush1.bf16.msra.mxu0 %v236
    %259 = vmatprep.subr.bf16.mxu0 0
    %260 = vmatpush1.bf16.msra.mxu0 %v237
    %261 = vmatprep.subr.bf16.mxu0 0
    %262 = vmatpush1.bf16.msra.mxu0 %v238
    %263 = vmatprep.subr.bf16.mxu0 0
    %264 = vmatpush1.bf16.msra.mxu0 0
    %265 = vmatprep.subr.bf16.mxu0 0
    %266 = vmatpush1.bf16.msra.mxu0 0
    %267 = vmatprep.subr.bf16.mxu0 0
    %268 = vmatpush1.bf16.msra.mxu0 0
    %269 = vmatprep.subr.bf16.mxu0 0
    %270 = vmatpush1.bf16.msra.mxu0 0
    %271 = vmatprep.subr.bf16.mxu0 0
    %272 = vmatpush1.bf16.msra.mxu0 0
    %273 = vmatprep.subr.bf16.mxu0 0
    %274 = vmatpush1.bf16.msra.mxu0 0
    %275 = vmatprep.subr.bf16.mxu0 0
    %276 = vmatpush1.bf16.msra.mxu0 0
    %277 = vmatprep.subr.bf16.mxu0 0
    %278 = vmatpush1.bf16.msra.mxu0 0
    %279 = vmatprep.mubr.bf16.mxu0 0
    %280 = vmatmul.mubr.bf16.gmra.mrb[0].mxu0 %v175
    %v281 = vpop.f32.mrb[0].mxu0
    %v282 = vadd.f32 %v197, %v281
    %v283 = vpop.f32.mrb[0].mxu0
    %v284 = vpop.f32.mrb[0].mxu0
    %v285 = vpop.f32.mrb[0].mxu0
    %286 = vdwg.mxu0
    %v287 = vmax.f32 %v282, 0.0
    %v288 = vadd.f32 %v61, %v287
    %289 = vst [vmem:[#allocation8] sm:$0xff] %v288
    // Predicated region
    $region34: #{_resblock_call.1} parent=1 // pred_check
      _
    $region35: #{_resblock_call.1} parent=1 // pred_check_branch
      %291 = sbr.rel (0) target = $region37
    $region36: #{_resblock_call.1} parent=1 // pred_region
      %s293 = ssub.s32 128, 128
      %294 = vsyncadd [#allocation4], %s293
      %s296 = sshll.u32 [#allocation8], 4
      %s297 = int_to_ptr.vmem [resolvable:$true] %s296
      %299 = dma.vmem_to_hbm [thread:$0]  %s297, 128, %s5, [#allocation4]
    $region37: #{_resblock_call.1} parent=1 // pred_fallthru
      _
    // Predicated region
    $region38: #{_resblock_call.1} parent=1 // pred_check
      _
    $region39: #{_resblock_call.1} parent=1 // pred_check_branch
      %301 = sbr.rel (0) target = $region41
    $region40: #{_resblock_call.1} parent=1 // pred_region
      %302 = dma.done [#allocation4], 128
    $region41: #{_resblock_call.1} parent=1 // pred_fallthru
      _
    %303 = vsyncpa [#allocation3], 1
    %304 = vsyncpa [#allocation6], 1
    %305 = vsyncpa [#allocation4], 1

</llo_original>
